<compile_context>
chip_gen: v5e
topology: v5e:2x2
jax: 0.10.0
libtpu: 0.0.40
codegen_flags: <defaults>
</compile_context>

<pallas_src>
import math

import jax
import jax.numpy as jnp
import numpy as np
from jax import lax
from jax.experimental import pallas as pl
from jax.experimental.pallas import tpu as pltpu


def attn_kernel(hid_ref, enc_ref, const_ref, out_ref):
    # hid_ref   : (B, H)       last encoder hidden-state rows
    # enc_ref   : (T*B, H)     encoder outputs, native [T,B,H] flattened (r = t*B + b)
    # const_ref : (2H+16, H)   rows [0,H)=W_h^T, [H,2H)=W_e^T, row 2H=bias, row 2H+8=v
    # out_ref   : (B, T)       softmax attention weights
    b_sz, h = hid_ref.shape
    tb = enc_ref.shape[0]
    t = tb // b_sz

    w_h_t = const_ref[0:h, :]                      # (H, H)
    w_e_t = const_ref[h:2 * h, :]                  # (H, H)
    bias = const_ref[2 * h:2 * h + 1, :]           # (1, H)
    v_row = const_ref[2 * h + 8:2 * h + 9, :]      # (1, H)

    # Index masks relating flat row r = t*B + b to (t, b); built from iotas,
    # multiplies-by-constant and compares only (no vector integer div/mod).
    r_rt = lax.broadcasted_iota(jnp.int32, (tb, t), 0)            # r
    t_rt = lax.broadcasted_iota(jnp.int32, (tb, t), 1)            # t
    lo = t_rt * b_sz
    mask_rt = (r_rt >= lo) & (r_rt < lo + b_sz)                   # [r // B == t]
    # b-of-r as exact small floats via a masked lane reduce, then one-hot selector.
    b_col = jnp.sum(jnp.where(mask_rt, (r_rt - lo).astype(jnp.float32), 0.0),
                    axis=1, keepdims=True)                        # (T*B, 1)
    b_iota = lax.broadcasted_iota(jnp.int32, (tb, b_sz), 1).astype(jnp.float32)
    sel_t = (b_col == b_iota).astype(jnp.float32)                 # (T*B, B): [r % B == b]

    # Hidden half of the split linear (+ bias), computed once per batch row.
    hid_term = jnp.dot(hid_ref[...], w_h_t,
                       preferred_element_type=jnp.float32) + bias            # (B, H)

    # Encoder half: ONE batched matmul over all T*B rows, then relu(W@[h;e]+b).
    e = jnp.dot(enc_ref[...], w_e_t, preferred_element_type=jnp.float32)     # (T*B, H)
    hid_bcast = jnp.dot(sel_t, hid_term, preferred_element_type=jnp.float32) # (T*B, H)
    e = jnp.maximum(e + hid_bcast, 0.0)

    # v . energy: VPU multiply + lane reduce (no M=1 MXU matmul).
    s = jnp.sum(e * v_row, axis=-1, keepdims=True)                           # (T*B, 1)

    # Regroup r = t*B + b -> (B, T) with one tiny transposed selector matmul
    # (MXU idle, so effectively free; avoids in-kernel reshape/relayout).
    s_rt = jnp.where(mask_rt, s, 0.0)                                        # (T*B, T)
    scores = lax.dot_general(sel_t, s_rt, (((0,), (0,)), ((), ())),
                             preferred_element_type=jnp.float32)             # (B, T)

    # Numerically stable softmax over T (lane axis); exact divide.
    m = jnp.max(scores, axis=-1, keepdims=True)
    ex = jnp.exp(scores - m)
    out_ref[...] = (ex / jnp.sum(ex, axis=-1, keepdims=True)).astype(out_ref.dtype)


def prepare_attention_params(W, bias, v):
    """Pack constant parameters into one sublane-aligned slab.  Done ONCE at
    parameter-load time (not per forward call):
      rows [0, H)   : W[:, :H].T   (hidden half of the linear)
      rows [H, 2H)  : W[:, H:].T   (encoder half of the linear)
      row  2H       : bias
      row  2H + 8   : v
    """
    H = W.shape[0]
    assert H % 8 == 0, "H must be sublane-aligned for the packed slab slices"
    pad8 = lambda row: jnp.pad(row[None, :].astype(jnp.float32), ((0, 7), (0, 0)))
    return jnp.concatenate(
        [W[:, :H].T.astype(jnp.float32), W[:, H:].T.astype(jnp.float32),
         pad8(bias), pad8(v)], axis=0)                           # (2H+16, H)


def attention_forward(hidden, encoder_outputs, const_slab):
    """hidden: [1,B,H], encoder_outputs: [T,B,H], const_slab from
    prepare_attention_params  ->  softmax attention weights [B, 1, T]."""
    T, B, H = encoder_outputs.shape
    hid = hidden[0]                                  # (B, H)     free squeeze
    enc_flat = encoder_outputs.reshape(T * B, H)     # (T*B, H)   free reshape, no HBM transpose

    out_bt = pl.pallas_call(
        attn_kernel,
        out_shape=jax.ShapeDtypeStruct((B, T), jnp.float32),
        # Whole arrays in VMEM, single grid step: at these shapes the kernel is
        # DMA/launch-latency bound, so extra grid steps (or v7x dual-TC
        # sharding) would only add per-step overhead.  For large B, add a batch
        # grid with batch_block % 8 == 0, keeping full-T lanes on this output.
        in_specs=[
            pl.BlockSpec(memory_space=pltpu.MemorySpace.VMEM),
            pl.BlockSpec(memory_space=pltpu.MemorySpace.VMEM),
            pl.BlockSpec(memory_space=pltpu.MemorySpace.VMEM),
        ],
        out_specs=pl.BlockSpec(memory_space=pltpu.MemorySpace.VMEM),
    )(hid, enc_flat, const_slab)

    return out_bt[:, None, :]                        # (B, 1, T)  metadata-only reshape


def reference_forward(hidden, encoder_outputs, W, bias, v):
    """Pure-JAX reference matching the PyTorch module."""
    T, B, H = encoder_outputs.shape
    h = jnp.transpose(jnp.tile(hidden, (T, 1, 1)), (1, 0, 2))       # [B, T, H]
    enc = jnp.transpose(encoder_outputs, (1, 0, 2))                 # [B, T, H]
    cat = jnp.concatenate([h, enc], axis=2)                         # [B, T, 2H]
    energy = jax.nn.relu(jnp.einsum("bth,oh->bto", cat, W) + bias)  # [B, T, H]
    scores = jnp.einsum("bth,h->bt", energy, v)                     # [B, T]
    return jax.nn.softmax(scores, axis=1)[:, None, :]               # [B, 1, T]


if __name__ == "__main__":
    B, T, H = 2, 8, 32

    key = jax.random.PRNGKey(0)
    k1, k2, k3, k4, k5 = jax.random.split(key, 5)

    # nn.Linear(2H, H) params: weight [H, 2H], bias [H]
    bound = 1.0 / math.sqrt(2 * H)
    W = jax.random.uniform(k1, (H, 2 * H), jnp.float32, -bound, bound)
    bias = jax.random.uniform(k2, (H,), jnp.float32, -bound, bound)
    # v ~ Normal(0, 1/sqrt(H))
    v = jax.random.normal(k3, (H,), jnp.float32) * (1.0 / math.sqrt(H))

    hidden = jax.random.normal(k4, (1, B, H), jnp.float32)
    encoder_outputs = jax.random.normal(k5, (T, B, H), jnp.float32)

    const_slab = prepare_attention_params(W, bias, v)   # once, at load time
    attn_fn = jax.jit(attention_forward)

    out = attn_fn(hidden, encoder_outputs, const_slab)
    out = jax.block_until_ready(out)

    ref = reference_forward(hidden, encoder_outputs, W, bias, v)
    np.testing.assert_allclose(np.asarray(out), np.asarray(ref), rtol=1e-5, atol=1e-5)
    assert out.shape == (B, 1, T)
    print("KERNEL_OK")
</pallas_src>

<mosaic_0001>
module attributes {stable_mosaic.version = 11 : i64} {
  func.func @attn_kernel(%arg0: memref<2x32xf32, #tpu.memory_space<vmem>>, %arg1: memref<16x32xf32, #tpu.memory_space<vmem>>, %arg2: memref<80x32xf32, #tpu.memory_space<vmem>>, %arg3: memref<2x8xf32, #tpu.memory_space<vmem>>) attributes {dimension_semantics = [], scalar_prefetch = 0 : i64, scratch_operands = 0 : i64, tpu.core_type = #tpu.core_type<tc>} {
    %c0 = arith.constant 0 : index
    %c0_0 = arith.constant 0 : index
    %0 = vector.load %arg2[%c0, %c0_0] : memref<80x32xf32, #tpu.memory_space<vmem>>, vector<32x32xf32>
    %c32 = arith.constant 32 : index
    %c0_1 = arith.constant 0 : index
    %1 = vector.load %arg2[%c32, %c0_1] : memref<80x32xf32, #tpu.memory_space<vmem>>, vector<32x32xf32>
    %c64 = arith.constant 64 : index
    %c0_2 = arith.constant 0 : index
    %2 = vector.load %arg2[%c64, %c0_2] : memref<80x32xf32, #tpu.memory_space<vmem>>, vector<1x32xf32>
    %c72 = arith.constant 72 : index
    %c0_3 = arith.constant 0 : index
    %3 = vector.load %arg2[%c72, %c0_3] : memref<80x32xf32, #tpu.memory_space<vmem>>, vector<1x32xf32>
    %4 = tpu.iota {dimensions = array<i32: 0>} : vector<16x8xi32>
    %5 = tpu.iota {dimensions = array<i32: 1>} : vector<16x8xi32>
    %c2_i32 = arith.constant 2 : i32
    %6 = vector.broadcast %c2_i32 : i32 to vector<16x8xi32>
    %7 = arith.muli %5, %6 : vector<16x8xi32>
    %8 = arith.cmpi sge, %4, %7 : vector<16x8xi32>
    %c2_i32_4 = arith.constant 2 : i32
    %9 = vector.broadcast %c2_i32_4 : i32 to vector<16x8xi32>
    %10 = arith.addi %7, %9 : vector<16x8xi32>
    %11 = arith.cmpi slt, %4, %10 : vector<16x8xi32>
    %12 = arith.andi %8, %11 : vector<16x8xi1>
    %13 = arith.subi %4, %7 : vector<16x8xi32>
    %14 = arith.sitofp %13 : vector<16x8xi32> to vector<16x8xf32>
    %cst = arith.constant 0.000000e+00 : f32
    %15 = vector.broadcast %cst : f32 to vector<16x8xf32>
    %16 = arith.select %12, %14, %15 : vector<16x8xi1>, vector<16x8xf32>
    %cst_5 = arith.constant dense<0.000000e+00> : vector<16xf32>
    %17 = vector.multi_reduction <add>, %16, %cst_5 [1] : vector<16x8xf32> to vector<16xf32>
    %18 = vector.shape_cast %17 : vector<16xf32> to vector<16x1xf32>
    %19 = tpu.iota {dimensions = array<i32: 1>} : vector<16x2xi32>
    %20 = arith.sitofp %19 : vector<16x2xi32> to vector<16x2xf32>
    %21 = vector.broadcast %18 : vector<16x1xf32> to vector<16x2xf32>
    %22 = arith.cmpf oeq, %21, %20 : vector<16x2xf32>
    %23 = arith.extui %22 : vector<16x2xi1> to vector<16x2xi32>
    %24 = arith.sitofp %23 : vector<16x2xi32> to vector<16x2xf32>
    %c0_6 = arith.constant 0 : index
    %c0_7 = arith.constant 0 : index
    %25 = vector.load %arg0[%c0_6, %c0_7] : memref<2x32xf32, #tpu.memory_space<vmem>>, vector<2x32xf32>
    %cst_8 = arith.constant dense<0.000000e+00> : vector<2x32xf32>
    %26 = tpu.matmul %25, %0, %cst_8 {dimension_numbers = #tpu.dot_dimension_numbers<[1], [0], [0], [1], [0, 0, 1, 1], [], []>} : vector<2x32xf32>, vector<32x32xf32>, vector<2x32xf32> -> vector<2x32xf32>
    %27 = vector.broadcast %2 : vector<1x32xf32> to vector<2x32xf32>
    %28 = arith.addf %26, %27 : vector<2x32xf32>
    %c0_9 = arith.constant 0 : index
    %c0_10 = arith.constant 0 : index
    %29 = vector.load %arg1[%c0_9, %c0_10] : memref<16x32xf32, #tpu.memory_space<vmem>>, vector<16x32xf32>
    %cst_11 = arith.constant dense<0.000000e+00> : vector<16x32xf32>
    %30 = tpu.matmul %29, %1, %cst_11 {dimension_numbers = #tpu.dot_dimension_numbers<[1], [0], [0], [1], [0, 0, 1, 1], [], []>} : vector<16x32xf32>, vector<32x32xf32>, vector<16x32xf32> -> vector<16x32xf32>
    %cst_12 = arith.constant dense<0.000000e+00> : vector<16x32xf32>
    %31 = tpu.matmul %24, %28, %cst_12 {dimension_numbers = #tpu.dot_dimension_numbers<[1], [0], [0], [1], [0, 0, 1, 1], [], []>} : vector<16x2xf32>, vector<2x32xf32>, vector<16x32xf32> -> vector<16x32xf32>
    %32 = arith.addf %30, %31 : vector<16x32xf32>
    %cst_13 = arith.constant 0.000000e+00 : f32
    %33 = vector.broadcast %cst_13 : f32 to vector<16x32xf32>
    %34 = arith.maximumf %32, %33 : vector<16x32xf32>
    %35 = vector.broadcast %3 : vector<1x32xf32> to vector<16x32xf32>
    %36 = arith.mulf %34, %35 : vector<16x32xf32>
    %cst_14 = arith.constant dense<0.000000e+00> : vector<16xf32>
    %37 = vector.multi_reduction <add>, %36, %cst_14 [1] : vector<16x32xf32> to vector<16xf32>
    %38 = vector.shape_cast %37 : vector<16xf32> to vector<16x1xf32>
    %cst_15 = arith.constant 0.000000e+00 : f32
    %39 = vector.shape_cast %38 : vector<16x1xf32> to vector<16x1xf32>
    %40 = vector.broadcast %39 : vector<16x1xf32> to vector<16x8xf32>
    %41 = vector.broadcast %cst_15 : f32 to vector<16x8xf32>
    %42 = arith.select %12, %40, %41 : vector<16x8xi1>, vector<16x8xf32>
    %cst_16 = arith.constant dense<0.000000e+00> : vector<2x8xf32>
    %43 = tpu.matmul %24, %42, %cst_16 {dimension_numbers = #tpu.dot_dimension_numbers<[0], [0], [1], [1], [0, 1, 1, 1], [], []>} : vector<16x2xf32>, vector<16x8xf32>, vector<2x8xf32> -> vector<2x8xf32>
    %cst_17 = arith.constant dense<0xFF800000> : vector<2xf32>
    %44 = vector.multi_reduction <maximumf>, %43, %cst_17 [1] : vector<2x8xf32> to vector<2xf32>
    %45 = vector.shape_cast %44 : vector<2xf32> to vector<2x1xf32>
    %46 = vector.broadcast %45 : vector<2x1xf32> to vector<2x8xf32>
    %47 = arith.subf %43, %46 : vector<2x8xf32>
    %48 = math.exp %47 : vector<2x8xf32>
    %cst_18 = arith.constant dense<0.000000e+00> : vector<2xf32>
    %49 = vector.multi_reduction <add>, %48, %cst_18 [1] : vector<2x8xf32> to vector<2xf32>
    %50 = vector.shape_cast %49 : vector<2xf32> to vector<2x1xf32>
    %51 = vector.broadcast %50 : vector<2x1xf32> to vector<2x8xf32>
    %52 = arith.divf %48, %51 : vector<2x8xf32>
    %c0_19 = arith.constant 0 : index
    %c0_20 = arith.constant 0 : index
    %53 = vector.load %arg3[%c0_19, %c0_20] : memref<2x8xf32, #tpu.memory_space<vmem>>, vector<2x8xf32>
    tpu.vector_store %arg3[%c0_19, %c0_20], %52 {strides = array<i32>} : memref<2x8xf32, #tpu.memory_space<vmem>>, vector<2x8xf32>,
    return
  }
}

</mosaic_0001>

<llo_original>
// kernel: attention_forward.1
$region0: #{attention_forward.1}
  #allocation0 [shape = 'u32[]', space=smem, size = 0x4, offset = 0x4, fixed_abs, tag = 'smem constant byte address 0x4 - core index']
  #allocation1 [shape = 'u32[72,128]{1,0:T(1,128)}', space=vmem, size = 0x9000, scoped, tag = 'internal scratch']
  %s0 = inlined_call_operand.vmem [shape: f32[2,32], index: 0, kind: input, shape index: {}]
  %s1 = inlined_call_operand.vmem [shape: f32[16,32], index: 1, kind: input, shape index: {}]
  %s2 = inlined_call_operand.vmem [shape: f32[80,32], index: 2, kind: input, shape index: {}]
  %s3 = inlined_call_operand.hbm [shape: f32[2,8], index: 3, kind: output, shape index: {}]
  %s4 = sld [smem:[#allocation0]]
  $region22: #{attention_forward.1} parent=0
    _
  %s6 = ssub.s32 1, %s4
  %s7 = scalar_select 0, %s6, %s4
  $region1: #{attention_forward.1} parent=0
    #allocation2 [shape = 'u8[1024]{0}', space=vmem, size = 0x400, scoped, tag = 'output window, operand 0, single buffered']
    #allocation3 [shape = 's32[1]{0}', space=sflag, size = 0x4, scoped, tag = 'scoped memory for attention_forward.1']
    %8 = vsyncpa [#allocation3], 0
    // Predicated region
    $region2: #{attention_forward.1} parent=1 // pred_check
      _
    $region3: #{attention_forward.1} parent=1 // pred_check_branch
      %10 = sbr.rel (0) target = $region5
    $region4: #{attention_forward.1} parent=1 // pred_region
      _
    $region5: #{attention_forward.1} parent=1 // pred_fallthru
      _
    // Predicated region
    $region6: #{attention_forward.1} parent=1 // pred_check
      _
    $region7: #{attention_forward.1} parent=1 // pred_check_branch
      %12 = sbr.rel (0) target = $region9
    $region8: #{attention_forward.1} parent=1 // pred_region
      _
    $region9: #{attention_forward.1} parent=1 // pred_fallthru
      _
    // Predicated region
    $region10: #{attention_forward.1} parent=1 // pred_check
      _
    $region11: #{attention_forward.1} parent=1 // pred_check_branch
      %14 = sbr.rel (0) target = $region13
    $region12: #{attention_forward.1} parent=1 // pred_region
      _
    $region13: #{attention_forward.1} parent=1 // pred_fallthru
      _
    %v15 = vld [vmem:[%s2] sm:$0xff]
    %v16 = vld [vmem:[%s2 + $0x8] sm:$0xff]
    %v17 = vld [vmem:[%s2 + $0x10] sm:$0xff]
    %v18 = vld [vmem:[%s2 + $0x18] sm:$0xff]
    %v19 = vld [vmem:[%s2 + $0x20] sm:$0xff]
    %v20 = vld [vmem:[%s2 + $0x28] sm:$0xff]
    %v21 = vld [vmem:[%s2 + $0x30] sm:$0xff]
    %v22 = vld [vmem:[%s2 + $0x38] sm:$0xff]
    %v23 = vld [vmem:[%s2 + $0x40] sm:$0x1]
    %v24 = vld [vmem:[%s2 + $0x48] sm:$0x1]
    %v25 = vlaneseq
    %v26 = vshrl.u32 %v25, 7
    %v27 = vadd.s32 %v26, 8
    %v28 = vlaneseq
    %v29 = vand.u32 %v28, 127
    %v30 = vmul.u32 %v29, 2
    %vm31 = vcmp.ge.s32.totalorder %v26, %v30
    %vm32 = vcmp.ge.s32.totalorder %v27, %v30
    %v33 = vadd.s32 %v30, 2
    %vm34 = vcmp.lt.s32.totalorder %v26, %v33
    %vm35 = vcmp.lt.s32.totalorder %v27, %v33
    %vm36 = vmand %vm31, %vm34
    %vm37 = vmand %vm32, %vm35
    %v38 = vsub.s32 %v26, %v30
    %v39 = vsub.s32 %v27, %v30
    %v40 = vcvt.s32.f32 %v38
    %v41 = vcvt.s32.f32 %v39
    %v42 = vsel %vm36, %v40, 0.0
    %v43 = vsel %vm37, %v41, 0.0
    %vm44 = vcmask 64512
    %v45 = vsel %vm44, %v42, 0.0
    %46 = vadd.xlane.f32.xlu0 %v45
    %v47 = vpop.xlane.xlu0 %46
    %v48 = vsel %vm44, %v43, 0.0
    %49 = vadd.xlane.f32.xlu0 %v48
    %v50 = vpop.xlane.xlu0 %49
    %v51 = vcvt.s32.f32 %v29
    %vm52 = vcmp.eq.f32.partialorder %v47, %v51
    %vm53 = vcmp.eq.f32.partialorder %v50, %v51
    %v54 = vsel %vm52, 1, 0
    %v55 = vsel %vm53, 1, 0
    %v56 = vcvt.s32.f32 %v54
    %v57 = vcvt.s32.f32 %v55
    %v58 = vld [vmem:[%s0] sm:$0x3]
    %v59 = vperm.slane %v23, 0
    %vm60 = vcmask 261120
    %v62 = vsel %vm60, %v58, 0
    %64 = vmatpush.msra.mxu0 0.0
    %65 = vmatpush.msra.mxu0 0.0
    %66 = vmatpush.msra.mxu0 0.0
    %67 = vmatpush.msra.mxu0 0.0
    %68 = vmatpush.msra.mxu0 0.0
    %69 = vmatpush.msra.mxu0 0.0
    %70 = vmatpush.msra.mxu0 0.0
    %71 = vmatpush.msra.mxu0 0.0
    %72 = vmatpush.msra.mxu0 0.0
    %73 = vmatpush.msra.mxu0 0.0
    %74 = vmatpush.msra.mxu0 0.0
    %75 = vmatpush.msra.mxu0 0.0
    %76 = vmatpush.msra.mxu0 %v18
    %77 = vmatpush.msra.mxu0 %v17
    %78 = vmatpush.msra.mxu0 %v16
    %79 = vmatpush.msra.mxu0 %v15
    %80 = vmatmul.f32.gmra.mxu0 %v62
    %v81 = vpop.f32.mrf.mxu0
    %v82 = vadd.f32 %v59, %v81
    %83 = vdwg.mxu0
    %v84 = vld [vmem:[%s1] sm:$0xff]
    %v85 = vld [vmem:[%s1 + $0x8] sm:$0xff]
    %vm86 = vcmask 15360
    %v88 = vsel %vm86, %v56, 0
    %v91 = vsel %vm86, %v57, 0
    %vm93 = vcmask 1041408
    %v95 = vsel %vm93, %v82, 0
    %97 = vmatpush.msra.mxu0 0.0
    %98 = vmatpush.msra.mxu0 0.0
    %99 = vmatpush.msra.mxu0 0.0
    %100 = vmatpush.msra.mxu0 0.0
    %101 = vmatpush.msra.mxu0 0.0
    %102 = vmatpush.msra.mxu0 0.0
    %103 = vmatpush.msra.mxu0 0.0
    %104 = vmatpush.msra.mxu0 0.0
    %105 = vmatpush.msra.mxu0 0.0
    %106 = vmatpush.msra.mxu0 0.0
    %107 = vmatpush.msra.mxu0 0.0
    %108 = vmatpush.msra.mxu0 0.0
    %109 = vmatpush.msra.mxu0 0.0
    %110 = vmatpush.msra.mxu0 0.0
    %111 = vmatpush.msra.mxu0 0.0
    %112 = vmatpush.msra.mxu0 %v95
    %113 = vmatmul.f32.gmra.mxu0 %v88
    %v114 = vpop.f32.mrf.mxu0
    %v115 = vadd.f32 0.0, %v114
    %116 = vmatmul.f32.gmra.mxu0 %v91
    %v117 = vpop.f32.mrf.mxu0
    %v118 = vadd.f32 0.0, %v117
    %119 = vdwg.mxu0
    %v121 = vsel %vm60, %v84, 0
    %v124 = vsel %vm60, %v85, 0
    %126 = vmatpush.msra.mxu0 0.0
    %127 = vmatpush.msra.mxu0 0.0
    %128 = vmatpush.msra.mxu0 0.0
    %129 = vmatpush.msra.mxu0 0.0
    %130 = vmatpush.msra.mxu0 0.0
    %131 = vmatpush.msra.mxu0 0.0
    %132 = vmatpush.msra.mxu0 0.0
    %133 = vmatpush.msra.mxu0 0.0
    %134 = vmatpush.msra.mxu0 0.0
    %135 = vmatpush.msra.mxu0 0.0
    %136 = vmatpush.msra.mxu0 0.0
    %137 = vmatpush.msra.mxu0 0.0
    %138 = vmatpush.msra.mxu0 %v22
    %139 = vmatpush.msra.mxu0 %v21
    %140 = vmatpush.msra.mxu0 %v20
    %141 = vmatpush.msra.mxu0 %v19
    %142 = vmatmul.f32.gmra.mxu0 %v121
    %v143 = vpop.f32.mrf.mxu0
    %v144 = vadd.f32 %v115, %v143
    %145 = vmatmul.f32.gmra.mxu0 %v124
    %v146 = vpop.f32.mrf.mxu0
    %v147 = vadd.f32 %v118, %v146
    %148 = vdwg.mxu0
    %v149 = vmax.f32 %v144, 0.0
    %v150 = vmax.f32 %v147, 0.0
    %v151 = vperm.slane %v24, 0
    %v152 = vmul.f32 %v149, %v151
    %v153 = vmul.f32 %v150, %v151
    %v154 = vsel %vm60, %v152, 0.0
    %155 = vadd.xlane.f32.xlu0 %v154
    %v156 = vpop.xlane.xlu0 %155
    %v157 = vsel %vm60, %v153, 0.0
    %158 = vadd.xlane.f32.xlu0 %v157
    %v159 = vpop.xlane.xlu0 %158
    %v160 = vsel %vm36, %v156, 0.0
    %v161 = vsel %vm37, %v159, 0.0
    %162 = vxpose.xlu0.b32.start [1/16] %v56, 128
    %163 = vxpose.xlu0.b32.cont [2/16] %v57, 128
    %164 = vxpose.xlu0.b32.cont [3/16] 0.0, 128
    %165 = vxpose.xlu0.b32.cont [4/16] 0.0, 128
    %166 = vxpose.xlu0.b32.cont [5/16] 0.0, 128
    %167 = vxpose.xlu0.b32.cont [6/16] 0.0, 128
    %168 = vxpose.xlu0.b32.cont [7/16] 0.0, 128
    %169 = vxpose.xlu0.b32.cont [8/16] 0.0, 128
    %170 = vxpose.xlu0.b32.cont [9/16] 0.0, 128
    %171 = vxpose.xlu0.b32.cont [10/16] 0.0, 128
    %172 = vxpose.xlu0.b32.cont [11/16] 0.0, 128
    %173 = vxpose.xlu0.b32.cont [12/16] 0.0, 128
    %174 = vxpose.xlu0.b32.cont [13/16] 0.0, 128
    %175 = vxpose.xlu0.b32.cont [14/16] 0.0, 128
    %176 = vxpose.xlu0.b32.cont [15/16] 0.0, 128
    %177 = vxpose.xlu0.b32.end [16/16] 0.0, 128
    %v178 = vpop.trf.xlu0
    %v179 = vpop.trf.xlu0
    %v180 = vpop.trf.xlu0
    %v181 = vpop.trf.xlu0
    %v182 = vpop.trf.xlu0
    %v183 = vpop.trf.xlu0
    %v184 = vpop.trf.xlu0
    %v185 = vpop.trf.xlu0
    %v186 = vpop.trf.xlu0
    %v187 = vpop.trf.xlu0
    %v188 = vpop.trf.xlu0
    %v189 = vpop.trf.xlu0
    %v190 = vpop.trf.xlu0
    %v191 = vpop.trf.xlu0
    %v192 = vpop.trf.xlu0
    %v193 = vpop.trf.xlu0
    %vm194 = vcmask 130048
    %v196 = vsel %vm194, %v178, 0
    %198 = vmatpush.msra.mxu0 0.0
    %199 = vmatpush.msra.mxu0 0.0
    %200 = vmatpush.msra.mxu0 0.0
    %201 = vmatpush.msra.mxu0 0.0
    %202 = vmatpush.msra.mxu0 0.0
    %203 = vmatpush.msra.mxu0 0.0
    %204 = vmatpush.msra.mxu0 0.0
    %205 = vmatpush.msra.mxu0 0.0
    %206 = vmatpush.msra.mxu0 0.0
    %207 = vmatpush.msra.mxu0 0.0
    %208 = vmatpush.msra.mxu0 0.0
    %209 = vmatpush.msra.mxu0 0.0
    %210 = vmatpush.msra.mxu0 0.0
    %211 = vmatpush.msra.mxu0 0.0
    %212 = vmatpush.msra.mxu0 %v161
    %213 = vmatpush.msra.mxu0 %v160
    %214 = vmatmul.f32.gmra.mxu0 %v196
    %v215 = vpop.f32.mrf.mxu0
    %v216 = vadd.f32 0.0, %v215
    %217 = vdwg.mxu0
    %vm218 = vcmask 58368
    %v219 = vsel %vm218, %v216, -inf
    %220 = vmax.xlane.f32.xlu0 %v219
    %v221 = vpop.xlane.xlu0 %220
    %v222 = vsub.f32 %v216, %v221
    %v223 = vmul.f32 %v222, 1.442695
    %v224 = vpow.pop %v223
    %v225 = vsel %vm218, %v224, 0.0
    %226 = vadd.xlane.f32.xlu0 %v225
    %v227 = vpop.xlane.xlu0 %226
    %v228 = vrcp.pop %v227
    %v229 = vmul.f32 %v227, %v228
    %v230 = vsub.f32 1.0, %v229
    %v231 = vmul.f32 %v228, %v230
    %v232 = vadd.f32 %v228, %v231
    %vm233 = vweird.f32 %v227
    %vm234 = vweird.f32 %v228
    %vm235 = vmor %vm233, %vm234
    %v236 = vsel %vm235, %v228, %v232
    %v237 = vand.u32 2147483647, %v227
    %vm238 = vcmp.eq.f32.partialorder %v237, 8.507059e+37
    %v239 = vand.u32 %v227, 2147483648
    %v240 = vor.u32 1.1754944e-38, %v239
    %v241 = vsel %vm238, %v240, %v236
    %v242 = vmul.f32 %v224, %v241
    %243 = vst.msk [vmem:[#allocation2] sm:$0x3] %vm218, %v242
    // Predicated region
    $region14: #{attention_forward.1} parent=1 // pred_check
      _
    $region15: #{attention_forward.1} parent=1 // pred_check_branch
      %245 = sbr.rel (0) target = $region17
    $region16: #{attention_forward.1} parent=1 // pred_region
      %247 = vsyncadd [#allocation3], 0
      %s249 = sshll.u32 [#allocation2], 4
      %s250 = int_to_ptr.vmem [resolvable:$true] %s249
      %s251 = sshll.u32 %s3, 4
      %s252 = int_to_ptr.hbm [resolvable:$true] %s251
      %254 = dma.vmem_to_hbm [thread:$0]  %s250, 32, %s252, [#allocation3]
    $region17: #{attention_forward.1} parent=1 // pred_fallthru
      _
    // Predicated region
    $region18: #{attention_forward.1} parent=1 // pred_check
      _
    $region19: #{attention_forward.1} parent=1 // pred_check_branch
      %256 = sbr.rel (0) target = $region21
    $region20: #{attention_forward.1} parent=1 // pred_region
      %258 = dma.done [#allocation3], 32
    $region21: #{attention_forward.1} parent=1 // pred_fallthru
      _
    %259 = vsyncpa [#allocation3], 1

</llo_original>
